<compile_context>
chip_gen: v6e
topology: v6e:2x2x1
jax: 0.10.0
libtpu: 0.0.40
codegen_flags: <defaults>
</compile_context>

<pallas_src>
import functools

import jax
import jax.numpy as jnp
from jax.experimental import pallas as pl
from jax.experimental.pallas import tpu as pltpu


def _round_up(n, m):
    return ((n + m - 1) // m) * m


# --------------------------------------------------------------------------- #
# Kernel 1: node-feature projection  h = x @ W
# --------------------------------------------------------------------------- #
def _proj_kernel(x_ref, w_ref, h_ref):
    h_ref[...] = jnp.dot(
        x_ref[...].astype(jnp.float32),
        w_ref[...].astype(jnp.float32),
        preferred_element_type=jnp.float32,
    ).astype(h_ref.dtype)


# --------------------------------------------------------------------------- #
# Kernel 2: fused attention (bias + LeakyReLU + mask + softmax + aggregation + ELU)
#   h_ref   : (Np, F)  projected features for ALL nodes (resident in VMEM)
#   a1_ref  : (F, 1)   first half of attention vector  (query / source side)
#   a2r_ref : (1, F)   second half of attention vector (neighbor side, as a row)
#   adj_ref : (bq, Np) adjacency rows for this query block
#   out_ref : (bq, F)
# --------------------------------------------------------------------------- #
def _gat_attn_kernel(h_ref, a1_ref, a2r_ref, adj_ref, out_ref, *, alpha, concat):
    i = pl.program_id(0)
    bq = out_ref.shape[0]
    row0 = pl.multiple_of(i * bq, bq)

    h_all = h_ref[...].astype(jnp.float32)              # (Np, F)
    h_q = h_ref[pl.ds(row0, bq), :].astype(jnp.float32)  # (bq, F)

    # e[i, j] = h[i].a1 + h[j].a2  (outer sum of two projections)
    f_src = jnp.dot(h_q, a1_ref[...].astype(jnp.float32),
                    preferred_element_type=jnp.float32)            # (bq, 1)
    f_dst = jnp.dot(a2r_ref[...].astype(jnp.float32), h_all.T,
                    preferred_element_type=jnp.float32)            # (1, Np)
    e = f_src + f_dst                                              # (bq, Np)

    # LeakyReLU
    e = jnp.where(e > 0, e, alpha * e)

    # mask non-edges (padded nodes have adj == 0, so they are masked too)
    e = jnp.where(adj_ref[...] > 0, e, jnp.float32(-9e15))

    # softmax over neighbors (last / lane axis), f32
    m = jnp.max(e, axis=-1, keepdims=True)
    p = jnp.exp(e - m)
    attn = p / jnp.sum(p, axis=-1, keepdims=True)

    # weighted aggregation
    h_prime = jnp.dot(attn, h_all, preferred_element_type=jnp.float32)  # (bq, F)

    if concat:
        # ELU (alpha = 1)
        h_prime = jnp.where(h_prime > 0, h_prime, jnp.exp(h_prime) - 1.0)

    out_ref[...] = h_prime.astype(out_ref.dtype)


# --------------------------------------------------------------------------- #
# Wrapper
# --------------------------------------------------------------------------- #
def graph_attention_layer(x, adj, W, a, *, alpha=0.2, concat=True, block_q=128):
    """Pallas-TPU forward of GraphAttentionLayer.

    x   : (N, in_features)
    adj : (N, N)            (>0 means edge)
    W   : (in_features, out_features)
    a   : (2*out_features, 1)
    """
    N, f_in = x.shape
    f_out = W.shape[1]
    assert W.shape[0] == f_in
    assert a.shape == (2 * f_out, 1)
    assert adj.shape == (N, N)

    # split attention vector once on the host side (tiny)
    a1 = a[:f_out, :]                       # (F, 1)
    a2r = a[f_out:, :].reshape(1, f_out)    # (1, F)

    # query-row block, multiple of 8 (sublane); pad N so it divides evenly
    bq = min(block_q, _round_up(N, 8))
    n_pad = _round_up(N, bq)
    if n_pad != N:
        x_p = jnp.pad(x, ((0, n_pad - N), (0, 0)))
        adj_p = jnp.pad(adj, ((0, n_pad - N), (0, n_pad - N)))
    else:
        x_p, adj_p = x, adj

    grid = (n_pad // bq,)

    # ---- 1) projection: h = x @ W ---------------------------------------- #
    h = pl.pallas_call(
        _proj_kernel,
        out_shape=jax.ShapeDtypeStruct((n_pad, f_out), jnp.float32),
        grid_spec=pltpu.PrefetchScalarGridSpec(
            num_scalar_prefetch=0,
            grid=grid,
            in_specs=[
                pl.BlockSpec((bq, f_in), lambda i: (i, 0)),
                pl.BlockSpec((f_in, f_out), lambda i: (0, 0)),
            ],
            out_specs=pl.BlockSpec((bq, f_out), lambda i: (i, 0)),
        ),
        compiler_params=pltpu.CompilerParams(dimension_semantics=("parallel",)),
    )(x_p, W)

    # ---- 2) fused attention ---------------------------------------------- #
    out_p = pl.pallas_call(
        functools.partial(_gat_attn_kernel, alpha=float(alpha), concat=bool(concat)),
        out_shape=jax.ShapeDtypeStruct((n_pad, f_out), x.dtype),
        grid_spec=pltpu.PrefetchScalarGridSpec(
            num_scalar_prefetch=0,
            grid=grid,
            in_specs=[
                pl.BlockSpec((n_pad, f_out), lambda i: (0, 0)),   # h (all nodes)
                pl.BlockSpec((f_out, 1), lambda i: (0, 0)),       # a[:F]
                pl.BlockSpec((1, f_out), lambda i: (0, 0)),       # a[F:]
                pl.BlockSpec((bq, n_pad), lambda i: (i, 0)),      # adj rows
            ],
            out_specs=pl.BlockSpec((bq, f_out), lambda i: (i, 0)),
        ),
        compiler_params=pltpu.CompilerParams(dimension_semantics=("parallel",)),
    )(h, a1, a2r, adj_p)

    return out_p[:N]


# --------------------------------------------------------------------------- #
# Pure-JAX reference (mirrors the PyTorch forward)
# --------------------------------------------------------------------------- #
def gat_reference(x, adj, W, a, alpha=0.2, concat=True):
    hp = jax.lax.Precision.HIGHEST
    h = jnp.dot(x, W, precision=hp)
    f_out = W.shape[1]
    f1 = jnp.dot(h, a[:f_out], precision=hp)   # (N, 1)
    f2 = jnp.dot(h, a[f_out:], precision=hp)   # (N, 1)
    e = f1 + f2.T                              # == matmul(a_input, a).squeeze(2)
    e = jnp.where(e > 0, e, alpha * e)         # LeakyReLU
    e = jnp.where(adj > 0, e, -9e15)
    attn = jax.nn.softmax(e, axis=1)
    h_prime = jnp.dot(attn, h, precision=hp)
    if concat:
        h_prime = jnp.where(h_prime > 0, h_prime, jnp.expm1(h_prime))  # ELU
    return h_prime


if __name__ == "__main__":
    key = jax.random.PRNGKey(0)
    k1, k2, k3, k4 = jax.random.split(key, 4)

    N, F_IN, F_OUT = 8, 32, 32
    ALPHA = 0.2

    x = jax.random.normal(k1, (N, F_IN), dtype=jnp.float32)

    # xavier_uniform-style init (gain = 1.414), deterministic from PRNGKey(0)
    lim_w = 1.414 * (6.0 / (F_IN + F_OUT)) ** 0.5
    W = jax.random.uniform(k2, (F_IN, F_OUT), jnp.float32, -lim_w, lim_w)
    lim_a = 1.414 * (6.0 / (2 * F_OUT + 1)) ** 0.5
    a = jax.random.uniform(k3, (2 * F_OUT, 1), jnp.float32, -lim_a, lim_a)

    # random adjacency with self-loops
    adj = (jax.random.uniform(k4, (N, N)) > 0.4).astype(jnp.float32)
    adj = jnp.maximum(adj, jnp.eye(N, dtype=jnp.float32))

    out = graph_attention_layer(x, adj, W, a, alpha=ALPHA, concat=True)
    out = jax.block_until_ready(out)

    ref = gat_reference(x, adj, W, a, alpha=ALPHA, concat=True)

    assert out.shape == (N, F_OUT) and out.dtype == x.dtype
    assert jnp.allclose(out, ref, atol=1e-3, rtol=1e-3), "mismatch vs reference"

    print("KERNEL_OK")
</pallas_src>

<mosaic_0001>
module attributes {stable_mosaic.version = 11 : i64} {
  func.func @_proj_kernel(%arg0: i32, %arg1: memref<8x32xf32, #tpu.memory_space<vmem>>, %arg2: memref<32x32xf32, #tpu.memory_space<vmem>>, %arg3: memref<8x32xf32, #tpu.memory_space<vmem>>) attributes {dimension_semantics = [#tpu.dimension_semantics<parallel>], iteration_bounds = array<i64: 1>, scalar_prefetch = 0 : i64, scratch_operands = 0 : i64, tpu.core_type = #tpu.core_type<tc>, window_params = [{transform_indices = @transform_0, window_bounds = array<i64: 8, 32>}, {pipeline_mode = #tpu.pipeline_mode<synchronous>, transform_indices = @transform_1, window_bounds = array<i64: 32, 32>}, {transform_indices = @transform_2, window_bounds = array<i64: 8, 32>}]} {
    %c0 = arith.constant 0 : index
    %c0_0 = arith.constant 0 : index
    %0 = vector.load %arg1[%c0, %c0_0] : memref<8x32xf32, #tpu.memory_space<vmem>>, vector<8x32xf32>
    %c0_1 = arith.constant 0 : index
    %c0_2 = arith.constant 0 : index
    %1 = vector.load %arg2[%c0_1, %c0_2] : memref<32x32xf32, #tpu.memory_space<vmem>>, vector<32x32xf32>
    %cst = arith.constant dense<0.000000e+00> : vector<8x32xf32>
    %2 = tpu.matmul %0, %1, %cst {dimension_numbers = #tpu.dot_dimension_numbers<[1], [0], [0], [1], [0, 0, 1, 1], [], []>} : vector<8x32xf32>, vector<32x32xf32>, vector<8x32xf32> -> vector<8x32xf32>
    %c0_3 = arith.constant 0 : index
    %c0_4 = arith.constant 0 : index
    %3 = vector.load %arg3[%c0_3, %c0_4] : memref<8x32xf32, #tpu.memory_space<vmem>>, vector<8x32xf32>
    tpu.vector_store %arg3[%c0_3, %c0_4], %2 {strides = array<i32>} : memref<8x32xf32, #tpu.memory_space<vmem>>, vector<8x32xf32>,
    return
  }
  func.func @transform_0(%arg0: i32) -> (i32, i32) {
    %c0_i32 = arith.constant 0 : i32
    %c0_i32_0 = arith.constant 0 : i32
    return %arg0, %c0_i32 : i32, i32
  }
  func.func @transform_1(%arg0: i32) -> (i32, i32) {
    %c0_i32 = arith.constant 0 : i32
    %c0_i32_0 = arith.constant 0 : i32
    %c0_i32_1 = arith.constant 0 : i32
    return %c0_i32, %c0_i32_0 : i32, i32
  }
  func.func @transform_2(%arg0: i32) -> (i32, i32) {
    %c0_i32 = arith.constant 0 : i32
    %c0_i32_0 = arith.constant 0 : i32
    return %arg0, %c0_i32 : i32, i32
  }
}

</mosaic_0001>

<llo_original>
// kernel: tpu_custom_call.1
$region0: #{tpu_custom_call.1}
  #allocation0 [shape = 'u32[]', space=smem, size = 0x4, offset = 0x4, fixed_abs, tag = 'smem constant byte address 0x4 - core index']
  #allocation1 [shape = 'u32[144,128]{1,0:T(1,128)}', space=vmem, size = 0x12000, scoped, tag = 'internal scratch']
  %s0 = inlined_call_operand.hbm [shape: f32[8,32], index: 0, kind: input, shape index: {}]
  %s1 = inlined_call_operand.hbm [shape: f32[32,32], index: 1, kind: input, shape index: {}]
  %s2 = inlined_call_operand.hbm [shape: f32[8,32], index: 2, kind: output, shape index: {}]
  %s3 = sld [smem:[#allocation0]]
  $region26: #{tpu_custom_call.1} parent=0
    _
  %s5 = ssub.s32 1, %s3
  %s6 = scalar_select 0, %s5, %s3
  $region1: #{tpu_custom_call.1} parent=0
    #allocation2 [shape = 'u8[4096]{0}', space=vmem, size = 0x1000, scoped, tag = 'input window, operand 0, single buffered']
    #allocation3 [shape = 's32[1]{0}', space=sflag, size = 0x4, scoped, tag = 'scoped memory for tpu_custom_call.1']
    #allocation4 [shape = 's32[1]{0}', space=sflag, size = 0x4, scoped, tag = 'scoped memory for tpu_custom_call.1']
    #allocation5 [shape = 'u8[16384]{0}', space=vmem, size = 0x4000, scoped, tag = 'input window, operand 1, single buffered']
    #allocation6 [shape = 's32[1]{0}', space=sflag, size = 0x4, scoped, tag = 'scoped memory for tpu_custom_call.1']
    #allocation7 [shape = 'u8[4096]{0}', space=vmem, size = 0x1000, scoped, tag = 'output window, operand 0, single buffered']
    %7 = vsyncpa [#allocation3], 0
    %8 = vsyncpa [#allocation6], 0
    %9 = vsyncpa [#allocation4], 0
    // Predicated region
    $region2: #{tpu_custom_call.1} parent=1 // pred_check
      _
    $region3: #{tpu_custom_call.1} parent=1 // pred_check_branch
      %11 = sbr.rel (0) target = $region5
    $region4: #{tpu_custom_call.1} parent=1 // pred_region
      %s13 = ssub.s32 128, 128
      %14 = vsyncadd [#allocation3], %s13
      %s16 = sshll.u32 [#allocation2], 4
      %s17 = int_to_ptr.vmem [resolvable:$true] %s16
      %19 = dma.hbm_to_vmem [thread:$0]  %s0, 128, %s17, [#allocation3]
    $region5: #{tpu_custom_call.1} parent=1 // pred_fallthru
      _
    // Predicated region
    $region6: #{tpu_custom_call.1} parent=1 // pred_check
      _
    $region7: #{tpu_custom_call.1} parent=1 // pred_check_branch
      %21 = sbr.rel (0) target = $region9
    $region8: #{tpu_custom_call.1} parent=1 // pred_region
      %s23 = ssub.s32 512, 512
      %24 = vsyncadd [#allocation6], %s23
      %s25 = sshll.u32 [#allocation5], 4
      %s26 = int_to_ptr.vmem [resolvable:$true] %s25
      %31 = dma.hbm_to_vmem [thread:$0]  %s1, 512, %s26, [#allocation6], 128, 128, 8
    $region9: #{tpu_custom_call.1} parent=1 // pred_fallthru
      _
    // Predicated region
    $region10: #{tpu_custom_call.1} parent=1 // pred_check
      _
    $region11: #{tpu_custom_call.1} parent=1 // pred_check_branch
      %33 = sbr.rel (0) target = $region13
    $region12: #{tpu_custom_call.1} parent=1 // pred_region
      %34 = dma.done [#allocation3], 128
    $region13: #{tpu_custom_call.1} parent=1 // pred_fallthru
      _
    // Predicated region
    $region14: #{tpu_custom_call.1} parent=1 // pred_check
      _
    $region15: #{tpu_custom_call.1} parent=1 // pred_check_branch
      %36 = sbr.rel (0) target = $region17
    $region16: #{tpu_custom_call.1} parent=1 // pred_region
      %37 = dma.done [#allocation6], 512
    $region17: #{tpu_custom_call.1} parent=1 // pred_fallthru
      _
    %v38 = vld [vmem:[#allocation2] sm:$0xff]
    %v39 = vld [vmem:[#allocation5] sm:$0xff]
    %v40 = vld [vmem:[#allocation5 + $0x8] sm:$0xff]
    %v41 = vld [vmem:[#allocation5 + $0x10] sm:$0xff]
    %v42 = vld [vmem:[#allocation5 + $0x18] sm:$0xff]
    %vm43 = vcmask 261120
    %v45 = vsel %vm43, %v38, 0
    %47 = vmatprep.subr.mxu0 0.0
    %48 = vmatpush1.msra.mxu0 0.0
    %49 = vmatprep.subr.mxu0 0.0
    %50 = vmatpush1.msra.mxu0 0.0
    %51 = vmatprep.subr.mxu0 0.0
    %52 = vmatpush1.msra.mxu0 0.0
    %53 = vmatprep.subr.mxu0 0.0
    %54 = vmatpush1.msra.mxu0 0.0
    %55 = vmatprep.subr.mxu0 0.0
    %56 = vmatpush1.msra.mxu0 0.0
    %57 = vmatprep.subr.mxu0 0.0
    %58 = vmatpush1.msra.mxu0 0.0
    %59 = vmatprep.subr.mxu0 0.0
    %60 = vmatpush1.msra.mxu0 0.0
    %61 = vmatprep.subr.mxu0 0.0
    %62 = vmatpush1.msra.mxu0 0.0
    %63 = vmatprep.subr.mxu0 0.0
    %64 = vmatpush1.msra.mxu0 0.0
    %65 = vmatprep.subr.mxu0 0.0
    %66 = vmatpush1.msra.mxu0 0.0
    %67 = vmatprep.subr.mxu0 0.0
    %68 = vmatpush1.msra.mxu0 0.0
    %69 = vmatprep.subr.mxu0 0.0
    %70 = vmatpush1.msra.mxu0 0.0
    %71 = vmatprep.subr.mxu0 0.0
    %72 = vmatpush1.msra.mxu0 %v42
    %73 = vmatprep.subr.mxu0 0.0
    %74 = vmatpush1.msra.mxu0 %v41
    %75 = vmatprep.subr.mxu0 0.0
    %76 = vmatpush1.msra.mxu0 %v40
    %77 = vmatprep.subr.mxu0 0.0
    %78 = vmatpush1.msra.mxu0 %v39
    %79 = vmatprep.subr.mxu0 0.0
    %80 = vmatpush2.msra.mxu0 0.0
    %81 = vmatprep.subr.mxu0 0.0
    %82 = vmatpush2.msra.mxu0 0.0
    %83 = vmatprep.subr.mxu0 0.0
    %84 = vmatpush2.msra.mxu0 0.0
    %85 = vmatprep.subr.mxu0 0.0
    %86 = vmatpush2.msra.mxu0 0.0
    %87 = vmatprep.subr.mxu0 0.0
    %88 = vmatpush2.msra.mxu0 0.0
    %89 = vmatprep.subr.mxu0 0.0
    %90 = vmatpush2.msra.mxu0 0.0
    %91 = vmatprep.subr.mxu0 0.0
    %92 = vmatpush2.msra.mxu0 0.0
    %93 = vmatprep.subr.mxu0 0.0
    %94 = vmatpush2.msra.mxu0 0.0
    %95 = vmatprep.subr.mxu0 0.0
    %96 = vmatpush2.msra.mxu0 0.0
    %97 = vmatprep.subr.mxu0 0.0
    %98 = vmatpush2.msra.mxu0 0.0
    %99 = vmatprep.subr.mxu0 0.0
    %100 = vmatpush2.msra.mxu0 0.0
    %101 = vmatprep.subr.mxu0 0.0
    %102 = vmatpush2.msra.mxu0 0.0
    %103 = vmatprep.subr.mxu0 0.0
    %104 = vmatpush2.msra.mxu0 0.0
    %105 = vmatprep.subr.mxu0 0.0
    %106 = vmatpush2.msra.mxu0 0.0
    %107 = vmatprep.subr.mxu0 0.0
    %108 = vmatpush2.msra.mxu0 0.0
    %109 = vmatprep.subr.mxu0 0.0
    %110 = vmatpush2.msra.mxu0 0.0
    %111 = vmatprep.mubr.f32.mxu0 0.0
    %112 = vmatmul.mubr.f32.gmra.mxu0 %v45
    %v113 = vpop.f32.mrf.mxu0
    %v114 = vadd.f32 0.0, %v113
    %v115 = vpop.f32.mrf.mxu0
    %116 = vdwg.mxu0
    %117 = vst.msk [vmem:[#allocation7] sm:$0xff] %vm43, %v114
    // Predicated region
    $region18: #{tpu_custom_call.1} parent=1 // pred_check
      _
    $region19: #{tpu_custom_call.1} parent=1 // pred_check_branch
      %119 = sbr.rel (0) target = $region21
    $region20: #{tpu_custom_call.1} parent=1 // pred_region
      %s121 = ssub.s32 128, 128
      %122 = vsyncadd [#allocation4], %s121
      %s124 = sshll.u32 [#allocation7], 4
      %s125 = int_to_ptr.vmem [resolvable:$true] %s124
      %127 = dma.vmem_to_hbm [thread:$0]  %s125, 128, %s2, [#allocation4]
    $region21: #{tpu_custom_call.1} parent=1 // pred_fallthru
      _
    // Predicated region
    $region22: #{tpu_custom_call.1} parent=1 // pred_check
      _
    $region23: #{tpu_custom_call.1} parent=1 // pred_check_branch
      %129 = sbr.rel (0) target = $region25
    $region24: #{tpu_custom_call.1} parent=1 // pred_region
      %130 = dma.done [#allocation4], 128
    $region25: #{tpu_custom_call.1} parent=1 // pred_fallthru
      _
    %131 = vsyncpa [#allocation3], 1
    %132 = vsyncpa [#allocation6], 1
    %133 = vsyncpa [#allocation4], 1

</llo_original>
